<compile_context>
chip_gen: v5e
topology: v5e:2x2
jax: 0.10.0
libtpu: 0.0.40
codegen_flags: <defaults>
</compile_context>

<pallas_src>
import functools

import jax
import jax.numpy as jnp
from jax.experimental import pallas as pl
from jax.experimental.pallas import tpu as pltpu


def _round_up(x: int, m: int) -> int:
    return pl.cdiv(x, m) * m


def dynamics_kernel(a_ref, b_ref, s_ref, u_ref, out_ref, *,
                    state_dims, in_state_dims, in_ctrl_dims):
    """VPU kernel for one lane tile of the fused linear dynamics step.

    a_ref   : (state_dims * in_state_dims,)  SMEM   flat A (row-major)
    b_ref   : (state_dims * in_ctrl_dims,)   SMEM   flat B (row-major)
    s_ref   : (in_state_dims, rb, 128)       VMEM   states^T tile (batch on sublanes+lanes)
    u_ref   : (in_ctrl_dims,  rb, 128)       VMEM   inputs^T tile
    out_ref : (state_dims,    rb, 128)       VMEM   next_states^T tile (dense slabs)
    """
    # Fully unrolled (4 x 6) = 24 scalar*slab FMAs on the VPU.  Weights come from SMEM
    # as scalars (scalar slot), data slabs are (rb, 128) sublane/lane-dense vregs.
    for sp in range(state_dims):
        acc = a_ref[sp * in_state_dims] * s_ref[0]
        for k in range(1, in_state_dims):
            acc = acc + a_ref[sp * in_state_dims + k] * s_ref[k]
        for k in range(in_ctrl_dims):
            acc = acc + b_ref[sp * in_ctrl_dims + k] * u_ref[k]
        out_ref[sp] = acc


def dynamics_forward_t(states_t, inputs_t, A, B, *, tn_cols_max: int = 131072):
    """Batch-on-lanes dynamics step.

    Args:
        states_t: (state_dims, N) float32      (i.e. states^T)
        inputs_t: (control_inputs, N) float32  (i.e. inputs^T)
        A:        (state_dims, state_dims)
        B:        (state_dims, control_inputs)
        tn_cols_max: max lane-tile width in batch columns (>= 1024, sized for ~3 MiB tiles)
    Returns:
        next_states_t: (state_dims, N) float32
    """
    states_t = states_t.astype(jnp.float32)
    inputs_t = inputs_t.astype(jnp.float32)

    s_dims, n = states_t.shape
    u_dims, n2 = inputs_t.shape
    assert n == n2, "states and inputs must share the batch dimension"

    # --- Tiling: 128-column blocks, multiple-of-8 sublane blocks per tile -----------
    nb = pl.cdiv(n, 128)                               # number of 128-column blocks
    rb_cap = max(8, (tn_cols_max // 128) // 8 * 8)     # sublane blocks per tile (cap)

    if nb <= 8:
        # Single tiny tile; block spans the full sublane-block axis, so the (8,128)
        # divisibility rule is satisfied by "equals the full array dim".
        rb, num_tiles = nb, 1
    else:
        # Target ~4 tiles (2 per TensorCore on v7x), capped at ~3 MiB of input per tile.
        rb = min(rb_cap, _round_up(pl.cdiv(nb, 4), 8))
        num_tiles = pl.cdiv(nb, rb)
    n_pad = num_tiles * rb * 128

    # --- Operands: pad batch to the tile grid, make sublane/lane-dense slabs --------
    if n_pad != n:
        states_t = jnp.pad(states_t, ((0, 0), (0, n_pad - n)))
        inputs_t = jnp.pad(inputs_t, ((0, 0), (0, n_pad - n)))
    st = states_t.reshape(s_dims, n_pad // 128, 128)   # free row-major reshape
    ut = inputs_t.reshape(u_dims, n_pad // 128, 128)

    # Tiny weights as flat 1-D SMEM arrays (no 2-D SMEM padding, no per-call concat).
    a_flat = A.astype(jnp.float32).reshape(-1)
    b_flat = B.astype(jnp.float32).reshape(-1)

    out = pl.pallas_call(
        functools.partial(dynamics_kernel, state_dims=s_dims,
                          in_state_dims=s_dims, in_ctrl_dims=u_dims),
        out_shape=jax.ShapeDtypeStruct((s_dims, n_pad // 128, 128), jnp.float32),
        grid_spec=pltpu.PrefetchScalarGridSpec(
            num_scalar_prefetch=0,
            grid=(num_tiles,),
            in_specs=[
                pl.BlockSpec(memory_space=pltpu.MemorySpace.SMEM),   # A flat
                pl.BlockSpec(memory_space=pltpu.MemorySpace.SMEM),   # B flat
                pl.BlockSpec((s_dims, rb, 128), lambda i: (0, i, 0)),
                pl.BlockSpec((u_dims, rb, 128), lambda i: (0, i, 0)),
            ],
            out_specs=pl.BlockSpec((s_dims, rb, 128), lambda i: (0, i, 0)),
        ),
        compiler_params=pltpu.CompilerParams(
            # Independent lane tiles: shard across v7x's two TensorCores; harmless on
            # single-TC v5e/v6e.  vmem_limit raised so v5e's 16 MiB default scoped
            # limit never clamps the large double-buffered tiles.
            dimension_semantics=("parallel",),
            vmem_limit_bytes=32 << 20,
        ),
    )(a_flat, b_flat, st, ut)

    return out.reshape(s_dims, n_pad)[:, :n]


def dynamics_forward(states, inputs, A, B, **kwargs):
    """Module-interface dynamics step: (N, S), (N, U) -> (N, S).

    TODO(synk): the two transposes below are pure interface plumbing for the PyTorch
    (N, state_dims) contract; rollout code that keeps its state in (dims, N) layout
    should call `dynamics_forward_t` directly and skip both HBM passes.
    """
    out_t = dynamics_forward_t(states.T, inputs.T, A, B, **kwargs)
    return out_t.T


if __name__ == "__main__":
    key = jax.random.PRNGKey(0)
    k1, k2, k3, k4 = jax.random.split(key, 4)

    N = 8               # batch of states
    state_dims = 4      # e.g. (x, y, theta, v)
    control_inputs = 2  # e.g. (steer, accel)

    states = jax.random.normal(k1, (N, state_dims), dtype=jnp.float32)
    inputs = jax.random.normal(k2, (N, control_inputs), dtype=jnp.float32)

    # Deterministic synthetic "parameters" for the linear dynamics instantiation.
    A = jnp.eye(state_dims, dtype=jnp.float32) + 0.01 * jax.random.normal(
        k3, (state_dims, state_dims), dtype=jnp.float32
    )
    B = 0.1 * jax.random.normal(k4, (state_dims, control_inputs), dtype=jnp.float32)

    out = jax.block_until_ready(dynamics_forward(states, inputs, A, B))
    ref = states @ A.T + inputs @ B.T
    assert out.shape == (N, state_dims)
    assert jnp.allclose(out, ref, atol=1e-5, rtol=1e-5)

    # Check 2: non-multiple-of-128 batch, single tile with batch padding.
    N2 = 300
    k5, k6 = jax.random.split(k1)
    states2 = jax.random.normal(k5, (N2, state_dims), dtype=jnp.float32)
    inputs2 = jax.random.normal(k6, (N2, control_inputs), dtype=jnp.float32)
    out2 = jax.block_until_ready(dynamics_forward(states2, inputs2, A, B))
    ref2 = states2 @ A.T + inputs2 @ B.T
    assert out2.shape == (N2, state_dims)
    assert jnp.allclose(out2, ref2, atol=1e-5, rtol=1e-5)

    # Check 3: batch large enough to trigger the multi-tile (grid > 1) pipelined path
    # with multiple-of-8 sublane blocks and bounded padding.
    N3 = 1200
    k7, k8 = jax.random.split(k2)
    states3 = jax.random.normal(k7, (N3, state_dims), dtype=jnp.float32)
    inputs3 = jax.random.normal(k8, (N3, control_inputs), dtype=jnp.float32)
    out3 = jax.block_until_ready(dynamics_forward(states3, inputs3, A, B))
    ref3 = states3 @ A.T + inputs3 @ B.T
    assert out3.shape == (N3, state_dims)
    assert jnp.allclose(out3, ref3, atol=1e-5, rtol=1e-5)

    print("KERNEL_OK")
</pallas_src>

<mosaic_0001>
module attributes {stable_mosaic.version = 11 : i64} {
  func.func @dynamics_kernel(%arg0: i32, %arg1: memref<16xf32, #tpu.memory_space<smem>>, %arg2: memref<8xf32, #tpu.memory_space<smem>>, %arg3: memref<4x1x128xf32, #tpu.memory_space<vmem>>, %arg4: memref<2x1x128xf32, #tpu.memory_space<vmem>>, %arg5: memref<4x1x128xf32, #tpu.memory_space<vmem>>) attributes {dimension_semantics = [#tpu.dimension_semantics<parallel>], iteration_bounds = array<i64: 1>, scalar_prefetch = 0 : i64, scratch_operands = 0 : i64, tpu.core_type = #tpu.core_type<tc>, window_params = [{transform_indices = @transform_0, window_bounds = array<i64: 16>}, {transform_indices = @transform_1, window_bounds = array<i64: 8>}, {transform_indices = @transform_2, window_bounds = array<i64: 4, 1, 128>}, {transform_indices = @transform_3, window_bounds = array<i64: 2, 1, 128>}, {transform_indices = @transform_4, window_bounds = array<i64: 4, 1, 128>}]} {
    %c0 = arith.constant 0 : index
    %0 = memref.load %arg1[%c0] : memref<16xf32, #tpu.memory_space<smem>>
    %c0_0 = arith.constant 0 : index
    %c0_1 = arith.constant 0 : index
    %c0_2 = arith.constant 0 : index
    %1 = vector.load %arg3[%c0_0, %c0_1, %c0_2] : memref<4x1x128xf32, #tpu.memory_space<vmem>>, vector<1x1x128xf32>
    %2 = vector.shape_cast %1 : vector<1x1x128xf32> to vector<1x128xf32>
    %3 = vector.broadcast %0 : f32 to vector<1x128xf32>
    %4 = arith.mulf %3, %2 : vector<1x128xf32>
    %c1 = arith.constant 1 : index
    %5 = memref.load %arg1[%c1] : memref<16xf32, #tpu.memory_space<smem>>
    %c1_3 = arith.constant 1 : index
    %c0_4 = arith.constant 0 : index
    %c0_5 = arith.constant 0 : index
    %6 = vector.load %arg3[%c1_3, %c0_4, %c0_5] : memref<4x1x128xf32, #tpu.memory_space<vmem>>, vector<1x1x128xf32>
    %7 = vector.shape_cast %6 : vector<1x1x128xf32> to vector<1x128xf32>
    %8 = vector.broadcast %5 : f32 to vector<1x128xf32>
    %9 = arith.mulf %8, %7 : vector<1x128xf32>
    %10 = arith.addf %4, %9 : vector<1x128xf32>
    %c2 = arith.constant 2 : index
    %11 = memref.load %arg1[%c2] : memref<16xf32, #tpu.memory_space<smem>>
    %c2_6 = arith.constant 2 : index
    %c0_7 = arith.constant 0 : index
    %c0_8 = arith.constant 0 : index
    %12 = vector.load %arg3[%c2_6, %c0_7, %c0_8] : memref<4x1x128xf32, #tpu.memory_space<vmem>>, vector<1x1x128xf32>
    %13 = vector.shape_cast %12 : vector<1x1x128xf32> to vector<1x128xf32>
    %14 = vector.broadcast %11 : f32 to vector<1x128xf32>
    %15 = arith.mulf %14, %13 : vector<1x128xf32>
    %16 = arith.addf %10, %15 : vector<1x128xf32>
    %c3 = arith.constant 3 : index
    %17 = memref.load %arg1[%c3] : memref<16xf32, #tpu.memory_space<smem>>
    %c3_9 = arith.constant 3 : index
    %c0_10 = arith.constant 0 : index
    %c0_11 = arith.constant 0 : index
    %18 = vector.load %arg3[%c3_9, %c0_10, %c0_11] : memref<4x1x128xf32, #tpu.memory_space<vmem>>, vector<1x1x128xf32>
    %19 = vector.shape_cast %18 : vector<1x1x128xf32> to vector<1x128xf32>
    %20 = vector.broadcast %17 : f32 to vector<1x128xf32>
    %21 = arith.mulf %20, %19 : vector<1x128xf32>
    %22 = arith.addf %16, %21 : vector<1x128xf32>
    %c0_12 = arith.constant 0 : index
    %23 = memref.load %arg2[%c0_12] : memref<8xf32, #tpu.memory_space<smem>>
    %c0_13 = arith.constant 0 : index
    %c0_14 = arith.constant 0 : index
    %c0_15 = arith.constant 0 : index
    %24 = vector.load %arg4[%c0_13, %c0_14, %c0_15] : memref<2x1x128xf32, #tpu.memory_space<vmem>>, vector<1x1x128xf32>
    %25 = vector.shape_cast %24 : vector<1x1x128xf32> to vector<1x128xf32>
    %26 = vector.broadcast %23 : f32 to vector<1x128xf32>
    %27 = arith.mulf %26, %25 : vector<1x128xf32>
    %28 = arith.addf %22, %27 : vector<1x128xf32>
    %c1_16 = arith.constant 1 : index
    %29 = memref.load %arg2[%c1_16] : memref<8xf32, #tpu.memory_space<smem>>
    %c1_17 = arith.constant 1 : index
    %c0_18 = arith.constant 0 : index
    %c0_19 = arith.constant 0 : index
    %30 = vector.load %arg4[%c1_17, %c0_18, %c0_19] : memref<2x1x128xf32, #tpu.memory_space<vmem>>, vector<1x1x128xf32>
    %31 = vector.shape_cast %30 : vector<1x1x128xf32> to vector<1x128xf32>
    %32 = vector.broadcast %29 : f32 to vector<1x128xf32>
    %33 = arith.mulf %32, %31 : vector<1x128xf32>
    %34 = arith.addf %28, %33 : vector<1x128xf32>
    %c0_20 = arith.constant 0 : index
    %c0_21 = arith.constant 0 : index
    %c0_22 = arith.constant 0 : index
    %35 = vector.load %arg5[%c0_20, %c0_21, %c0_22] : memref<4x1x128xf32, #tpu.memory_space<vmem>>, vector<1x1x128xf32>
    %36 = vector.shape_cast %35 : vector<1x1x128xf32> to vector<1x128xf32>
    %37 = vector.shape_cast %34 : vector<1x128xf32> to vector<1x1x128xf32>
    tpu.vector_store %arg5[%c0_20, %c0_21, %c0_22], %37 {strides = array<i32>} : memref<4x1x128xf32, #tpu.memory_space<vmem>>, vector<1x1x128xf32>,
    %c4 = arith.constant 4 : index
    %38 = memref.load %arg1[%c4] : memref<16xf32, #tpu.memory_space<smem>>
    %c0_23 = arith.constant 0 : index
    %c0_24 = arith.constant 0 : index
    %c0_25 = arith.constant 0 : index
    %39 = vector.load %arg3[%c0_23, %c0_24, %c0_25] : memref<4x1x128xf32, #tpu.memory_space<vmem>>, vector<1x1x128xf32>
    %40 = vector.shape_cast %39 : vector<1x1x128xf32> to vector<1x128xf32>
    %41 = vector.broadcast %38 : f32 to vector<1x128xf32>
    %42 = arith.mulf %41, %40 : vector<1x128xf32>
    %c5 = arith.constant 5 : index
    %43 = memref.load %arg1[%c5] : memref<16xf32, #tpu.memory_space<smem>>
    %c1_26 = arith.constant 1 : index
    %c0_27 = arith.constant 0 : index
    %c0_28 = arith.constant 0 : index
    %44 = vector.load %arg3[%c1_26, %c0_27, %c0_28] : memref<4x1x128xf32, #tpu.memory_space<vmem>>, vector<1x1x128xf32>
    %45 = vector.shape_cast %44 : vector<1x1x128xf32> to vector<1x128xf32>
    %46 = vector.broadcast %43 : f32 to vector<1x128xf32>
    %47 = arith.mulf %46, %45 : vector<1x128xf32>
    %48 = arith.addf %42, %47 : vector<1x128xf32>
    %c6 = arith.constant 6 : index
    %49 = memref.load %arg1[%c6] : memref<16xf32, #tpu.memory_space<smem>>
    %c2_29 = arith.constant 2 : index
    %c0_30 = arith.constant 0 : index
    %c0_31 = arith.constant 0 : index
    %50 = vector.load %arg3[%c2_29, %c0_30, %c0_31] : memref<4x1x128xf32, #tpu.memory_space<vmem>>, vector<1x1x128xf32>
    %51 = vector.shape_cast %50 : vector<1x1x128xf32> to vector<1x128xf32>
    %52 = vector.broadcast %49 : f32 to vector<1x128xf32>
    %53 = arith.mulf %52, %51 : vector<1x128xf32>
    %54 = arith.addf %48, %53 : vector<1x128xf32>
    %c7 = arith.constant 7 : index
    %55 = memref.load %arg1[%c7] : memref<16xf32, #tpu.memory_space<smem>>
    %c3_32 = arith.constant 3 : index
    %c0_33 = arith.constant 0 : index
    %c0_34 = arith.constant 0 : index
    %56 = vector.load %arg3[%c3_32, %c0_33, %c0_34] : memref<4x1x128xf32, #tpu.memory_space<vmem>>, vector<1x1x128xf32>
    %57 = vector.shape_cast %56 : vector<1x1x128xf32> to vector<1x128xf32>
    %58 = vector.broadcast %55 : f32 to vector<1x128xf32>
    %59 = arith.mulf %58, %57 : vector<1x128xf32>
    %60 = arith.addf %54, %59 : vector<1x128xf32>
    %c2_35 = arith.constant 2 : index
    %61 = memref.load %arg2[%c2_35] : memref<8xf32, #tpu.memory_space<smem>>
    %c0_36 = arith.constant 0 : index
    %c0_37 = arith.constant 0 : index
    %c0_38 = arith.constant 0 : index
    %62 = vector.load %arg4[%c0_36, %c0_37, %c0_38] : memref<2x1x128xf32, #tpu.memory_space<vmem>>, vector<1x1x128xf32>
    %63 = vector.shape_cast %62 : vector<1x1x128xf32> to vector<1x128xf32>
    %64 = vector.broadcast %61 : f32 to vector<1x128xf32>
    %65 = arith.mulf %64, %63 : vector<1x128xf32>
    %66 = arith.addf %60, %65 : vector<1x128xf32>
    %c3_39 = arith.constant 3 : index
    %67 = memref.load %arg2[%c3_39] : memref<8xf32, #tpu.memory_space<smem>>
    %c1_40 = arith.constant 1 : index
    %c0_41 = arith.constant 0 : index
    %c0_42 = arith.constant 0 : index
    %68 = vector.load %arg4[%c1_40, %c0_41, %c0_42] : memref<2x1x128xf32, #tpu.memory_space<vmem>>, vector<1x1x128xf32>
    %69 = vector.shape_cast %68 : vector<1x1x128xf32> to vector<1x128xf32>
    %70 = vector.broadcast %67 : f32 to vector<1x128xf32>
    %71 = arith.mulf %70, %69 : vector<1x128xf32>
    %72 = arith.addf %66, %71 : vector<1x128xf32>
    %c1_43 = arith.constant 1 : index
    %c0_44 = arith.constant 0 : index
    %c0_45 = arith.constant 0 : index
    %73 = vector.load %arg5[%c1_43, %c0_44, %c0_45] : memref<4x1x128xf32, #tpu.memory_space<vmem>>, vector<1x1x128xf32>
    %74 = vector.shape_cast %73 : vector<1x1x128xf32> to vector<1x128xf32>
    %75 = vector.shape_cast %72 : vector<1x128xf32> to vector<1x1x128xf32>
    tpu.vector_store %arg5[%c1_43, %c0_44, %c0_45], %75 {strides = array<i32>} : memref<4x1x128xf32, #tpu.memory_space<vmem>>, vector<1x1x128xf32>,
    %c8 = arith.constant 8 : index
    %76 = memref.load %arg1[%c8] : memref<16xf32, #tpu.memory_space<smem>>
    %c0_46 = arith.constant 0 : index
    %c0_47 = arith.constant 0 : index
    %c0_48 = arith.constant 0 : index
    %77 = vector.load %arg3[%c0_46, %c0_47, %c0_48] : memref<4x1x128xf32, #tpu.memory_space<vmem>>, vector<1x1x128xf32>
    %78 = vector.shape_cast %77 : vector<1x1x128xf32> to vector<1x128xf32>
    %79 = vector.broadcast %76 : f32 to vector<1x128xf32>
    %80 = arith.mulf %79, %78 : vector<1x128xf32>
    %c9 = arith.constant 9 : index
    %81 = memref.load %arg1[%c9] : memref<16xf32, #tpu.memory_space<smem>>
    %c1_49 = arith.constant 1 : index
    %c0_50 = arith.constant 0 : index
    %c0_51 = arith.constant 0 : index
    %82 = vector.load %arg3[%c1_49, %c0_50, %c0_51] : memref<4x1x128xf32, #tpu.memory_space<vmem>>, vector<1x1x128xf32>
    %83 = vector.shape_cast %82 : vector<1x1x128xf32> to vector<1x128xf32>
    %84 = vector.broadcast %81 : f32 to vector<1x128xf32>
    %85 = arith.mulf %84, %83 : vector<1x128xf32>
    %86 = arith.addf %80, %85 : vector<1x128xf32>
    %c10 = arith.constant 10 : index
    %87 = memref.load %arg1[%c10] : memref<16xf32, #tpu.memory_space<smem>>
    %c2_52 = arith.constant 2 : index
    %c0_53 = arith.constant 0 : index
    %c0_54 = arith.constant 0 : index
    %88 = vector.load %arg3[%c2_52, %c0_53, %c0_54] : memref<4x1x128xf32, #tpu.memory_space<vmem>>, vector<1x1x128xf32>
    %89 = vector.shape_cast %88 : vector<1x1x128xf32> to vector<1x128xf32>
    %90 = vector.broadcast %87 : f32 to vector<1x128xf32>
    %91 = arith.mulf %90, %89 : vector<1x128xf32>
    %92 = arith.addf %86, %91 : vector<1x128xf32>
    %c11 = arith.constant 11 : index
    %93 = memref.load %arg1[%c11] : memref<16xf32, #tpu.memory_space<smem>>
    %c3_55 = arith.constant 3 : index
    %c0_56 = arith.constant 0 : index
    %c0_57 = arith.constant 0 : index
    %94 = vector.load %arg3[%c3_55, %c0_56, %c0_57] : memref<4x1x128xf32, #tpu.memory_space<vmem>>, vector<1x1x128xf32>
    %95 = vector.shape_cast %94 : vector<1x1x128xf32> to vector<1x128xf32>
    %96 = vector.broadcast %93 : f32 to vector<1x128xf32>
    %97 = arith.mulf %96, %95 : vector<1x128xf32>
    %98 = arith.addf %92, %97 : vector<1x128xf32>
    %c4_58 = arith.constant 4 : index
    %99 = memref.load %arg2[%c4_58] : memref<8xf32, #tpu.memory_space<smem>>
    %c0_59 = arith.constant 0 : index
    %c0_60 = arith.constant 0 : index
    %c0_61 = arith.constant 0 : index
    %100 = vector.load %arg4[%c0_59, %c0_60, %c0_61] : memref<2x1x128xf32, #tpu.memory_space<vmem>>, vector<1x1x128xf32>
    %101 = vector.shape_cast %100 : vector<1x1x128xf32> to vector<1x128xf32>
    %102 = vector.broadcast %99 : f32 to vector<1x128xf32>
    %103 = arith.mulf %102, %101 : vector<1x128xf32>
    %104 = arith.addf %98, %103 : vector<1x128xf32>
    %c5_62 = arith.constant 5 : index
    %105 = memref.load %arg2[%c5_62] : memref<8xf32, #tpu.memory_space<smem>>
    %c1_63 = arith.constant 1 : index
    %c0_64 = arith.constant 0 : index
    %c0_65 = arith.constant 0 : index
    %106 = vector.load %arg4[%c1_63, %c0_64, %c0_65] : memref<2x1x128xf32, #tpu.memory_space<vmem>>, vector<1x1x128xf32>
    %107 = vector.shape_cast %106 : vector<1x1x128xf32> to vector<1x128xf32>
    %108 = vector.broadcast %105 : f32 to vector<1x128xf32>
    %109 = arith.mulf %108, %107 : vector<1x128xf32>
    %110 = arith.addf %104, %109 : vector<1x128xf32>
    %c2_66 = arith.constant 2 : index
    %c0_67 = arith.constant 0 : index
    %c0_68 = arith.constant 0 : index
    %111 = vector.load %arg5[%c2_66, %c0_67, %c0_68] : memref<4x1x128xf32, #tpu.memory_space<vmem>>, vector<1x1x128xf32>
    %112 = vector.shape_cast %111 : vector<1x1x128xf32> to vector<1x128xf32>
    %113 = vector.shape_cast %110 : vector<1x128xf32> to vector<1x1x128xf32>
    tpu.vector_store %arg5[%c2_66, %c0_67, %c0_68], %113 {strides = array<i32>} : memref<4x1x128xf32, #tpu.memory_space<vmem>>, vector<1x1x128xf32>,
    %c12 = arith.constant 12 : index
    %114 = memref.load %arg1[%c12] : memref<16xf32, #tpu.memory_space<smem>>
    %c0_69 = arith.constant 0 : index
    %c0_70 = arith.constant 0 : index
    %c0_71 = arith.constant 0 : index
    %115 = vector.load %arg3[%c0_69, %c0_70, %c0_71] : memref<4x1x128xf32, #tpu.memory_space<vmem>>, vector<1x1x128xf32>
    %116 = vector.shape_cast %115 : vector<1x1x128xf32> to vector<1x128xf32>
    %117 = vector.broadcast %114 : f32 to vector<1x128xf32>
    %118 = arith.mulf %117, %116 : vector<1x128xf32>
    %c13 = arith.constant 13 : index
    %119 = memref.load %arg1[%c13] : memref<16xf32, #tpu.memory_space<smem>>
    %c1_72 = arith.constant 1 : index
    %c0_73 = arith.constant 0 : index
    %c0_74 = arith.constant 0 : index
    %120 = vector.load %arg3[%c1_72, %c0_73, %c0_74] : memref<4x1x128xf32, #tpu.memory_space<vmem>>, vector<1x1x128xf32>
    %121 = vector.shape_cast %120 : vector<1x1x128xf32> to vector<1x128xf32>
    %122 = vector.broadcast %119 : f32 to vector<1x128xf32>
    %123 = arith.mulf %122, %121 : vector<1x128xf32>
    %124 = arith.addf %118, %123 : vector<1x128xf32>
    %c14 = arith.constant 14 : index
    %125 = memref.load %arg1[%c14] : memref<16xf32, #tpu.memory_space<smem>>
    %c2_75 = arith.constant 2 : index
    %c0_76 = arith.constant 0 : index
    %c0_77 = arith.constant 0 : index
    %126 = vector.load %arg3[%c2_75, %c0_76, %c0_77] : memref<4x1x128xf32, #tpu.memory_space<vmem>>, vector<1x1x128xf32>
    %127 = vector.shape_cast %126 : vector<1x1x128xf32> to vector<1x128xf32>
    %128 = vector.broadcast %125 : f32 to vector<1x128xf32>
    %129 = arith.mulf %128, %127 : vector<1x128xf32>
    %130 = arith.addf %124, %129 : vector<1x128xf32>
    %c15 = arith.constant 15 : index
    %131 = memref.load %arg1[%c15] : memref<16xf32, #tpu.memory_space<smem>>
    %c3_78 = arith.constant 3 : index
    %c0_79 = arith.constant 0 : index
    %c0_80 = arith.constant 0 : index
    %132 = vector.load %arg3[%c3_78, %c0_79, %c0_80] : memref<4x1x128xf32, #tpu.memory_space<vmem>>, vector<1x1x128xf32>
    %133 = vector.shape_cast %132 : vector<1x1x128xf32> to vector<1x128xf32>
    %134 = vector.broadcast %131 : f32 to vector<1x128xf32>
    %135 = arith.mulf %134, %133 : vector<1x128xf32>
    %136 = arith.addf %130, %135 : vector<1x128xf32>
    %c6_81 = arith.constant 6 : index
    %137 = memref.load %arg2[%c6_81] : memref<8xf32, #tpu.memory_space<smem>>
    %c0_82 = arith.constant 0 : index
    %c0_83 = arith.constant 0 : index
    %c0_84 = arith.constant 0 : index
    %138 = vector.load %arg4[%c0_82, %c0_83, %c0_84] : memref<2x1x128xf32, #tpu.memory_space<vmem>>, vector<1x1x128xf32>
    %139 = vector.shape_cast %138 : vector<1x1x128xf32> to vector<1x128xf32>
    %140 = vector.broadcast %137 : f32 to vector<1x128xf32>
    %141 = arith.mulf %140, %139 : vector<1x128xf32>
    %142 = arith.addf %136, %141 : vector<1x128xf32>
    %c7_85 = arith.constant 7 : index
    %143 = memref.load %arg2[%c7_85] : memref<8xf32, #tpu.memory_space<smem>>
    %c1_86 = arith.constant 1 : index
    %c0_87 = arith.constant 0 : index
    %c0_88 = arith.constant 0 : index
    %144 = vector.load %arg4[%c1_86, %c0_87, %c0_88] : memref<2x1x128xf32, #tpu.memory_space<vmem>>, vector<1x1x128xf32>
    %145 = vector.shape_cast %144 : vector<1x1x128xf32> to vector<1x128xf32>
    %146 = vector.broadcast %143 : f32 to vector<1x128xf32>
    %147 = arith.mulf %146, %145 : vector<1x128xf32>
    %148 = arith.addf %142, %147 : vector<1x128xf32>
    %c3_89 = arith.constant 3 : index
    %c0_90 = arith.constant 0 : index
    %c0_91 = arith.constant 0 : index
    %149 = vector.load %arg5[%c3_89, %c0_90, %c0_91] : memref<4x1x128xf32, #tpu.memory_space<vmem>>, vector<1x1x128xf32>
    %150 = vector.shape_cast %149 : vector<1x1x128xf32> to vector<1x128xf32>
    %151 = vector.shape_cast %148 : vector<1x128xf32> to vector<1x1x128xf32>
    tpu.vector_store %arg5[%c3_89, %c0_90, %c0_91], %151 {strides = array<i32>} : memref<4x1x128xf32, #tpu.memory_space<vmem>>, vector<1x1x128xf32>,
    return
  }
  func.func @transform_0(%arg0: i32) -> i32 {
    %c0_i32 = arith.constant 0 : i32
    %c0_i32_0 = arith.constant 0 : i32
    return %c0_i32 : i32
  }
  func.func @transform_1(%arg0: i32) -> i32 {
    %c0_i32 = arith.constant 0 : i32
    %c0_i32_0 = arith.constant 0 : i32
    return %c0_i32 : i32
  }
  func.func @transform_2(%arg0: i32) -> (i32, i32, i32) {
    %c0_i32 = arith.constant 0 : i32
    %c0_i32_0 = arith.constant 0 : i32
    %c0_i32_1 = arith.constant 0 : i32
    return %c0_i32, %arg0, %c0_i32_0 : i32, i32, i32
  }
  func.func @transform_3(%arg0: i32) -> (i32, i32, i32) {
    %c0_i32 = arith.constant 0 : i32
    %c0_i32_0 = arith.constant 0 : i32
    %c0_i32_1 = arith.constant 0 : i32
    return %c0_i32, %arg0, %c0_i32_0 : i32, i32, i32
  }
  func.func @transform_4(%arg0: i32) -> (i32, i32, i32) {
    %c0_i32 = arith.constant 0 : i32
    %c0_i32_0 = arith.constant 0 : i32
    %c0_i32_1 = arith.constant 0 : i32
    return %c0_i32, %arg0, %c0_i32_0 : i32, i32, i32
  }
}

</mosaic_0001>

<llo_original>
// kernel: tpu_custom_call.1
$region0: #{tpu_custom_call.1}
  #allocation0 [shape = 'u32[]', space=smem, size = 0x4, offset = 0x4, fixed_abs, tag = 'smem constant byte address 0x4 - core index']
  #allocation1 [shape = 'u32[72,128]{1,0:T(1,128)}', space=vmem, size = 0x9000, scoped, tag = 'internal scratch']
  %s0 = inlined_call_operand.hbm [shape: f32[16], index: 0, kind: input, shape index: {}]
  %s1 = inlined_call_operand.hbm [shape: f32[8], index: 1, kind: input, shape index: {}]
  %s2 = inlined_call_operand.hbm [shape: f32[4,1,128], index: 2, kind: input, shape index: {}]
  %s3 = inlined_call_operand.vmem [shape: f32[2,1,128], index: 3, kind: input, shape index: {}]
  %s4 = inlined_call_operand.hbm [shape: f32[4,1,128], index: 4, kind: output, shape index: {}]
  %s5 = sld [smem:[#allocation0]]
  $region38: #{tpu_custom_call.1} parent=0
    _
  %s7 = ssub.s32 1, %s5
  %s8 = scalar_select 0, %s7, %s5
  $region1: #{tpu_custom_call.1} parent=0
    #allocation2 [shape = 'u8[512]{0}', space=smem, size = 0x200, scoped, tag = 'input window, operand 0, single buffered']
    #allocation3 [shape = 's32[1]{0}', space=sflag, size = 0x4, scoped, tag = 'scoped memory for tpu_custom_call.1']
    #allocation4 [shape = 's32[1]{0}', space=sflag, size = 0x4, scoped, tag = 'scoped memory for tpu_custom_call.1']
    #allocation5 [shape = 's32[1]{0}', space=sflag, size = 0x4, scoped, tag = 'scoped memory for tpu_custom_call.1']
    #allocation6 [shape = 'u8[512]{0}', space=smem, size = 0x200, scoped, tag = 'input window, operand 1, single buffered']
    #allocation7 [shape = 's32[1]{0}', space=sflag, size = 0x4, scoped, tag = 'scoped memory for tpu_custom_call.1']
    #allocation8 [shape = 'u8[2048]{0}', space=vmem, size = 0x800, scoped, tag = 'input window, operand 2, single buffered']
    #allocation9 [shape = 'u8[2048]{0}', space=vmem, size = 0x800, scoped, tag = 'output window, operand 0, single buffered']
    %9 = vsyncpa [#allocation5], 0
    %10 = vsyncpa [#allocation7], 0
    %11 = vsyncpa [#allocation3], 0
    %12 = vsyncpa [#allocation4], 0
    // Predicated region
    $region2: #{tpu_custom_call.1} parent=1 // pred_check
      _
    $region3: #{tpu_custom_call.1} parent=1 // pred_check_branch
      %14 = sbr.rel (0) target = $region5
    $region4: #{tpu_custom_call.1} parent=1 // pred_region
      %16 = vsyncadd [#allocation5], 0
      %s18 = sshll.u32 %s0, 4
      %s19 = int_to_ptr.hbm [resolvable:$true] %s18
      %21 = dma.hbm_to_smem %s19, 16, [#allocation2], [#allocation5]
    $region5: #{tpu_custom_call.1} parent=1 // pred_fallthru
      _
    // Predicated region
    $region6: #{tpu_custom_call.1} parent=1 // pred_check
      _
    $region7: #{tpu_custom_call.1} parent=1 // pred_check_branch
      %23 = sbr.rel (0) target = $region9
    $region8: #{tpu_custom_call.1} parent=1 // pred_region
      %25 = vsyncadd [#allocation7], 0
      %s27 = sshll.u32 %s1, 4
      %s28 = int_to_ptr.hbm [resolvable:$true] %s27
      %30 = dma.hbm_to_smem %s28, 16, [#allocation6], [#allocation7]
    $region9: #{tpu_custom_call.1} parent=1 // pred_fallthru
      _
    // Predicated region
    $region10: #{tpu_custom_call.1} parent=1 // pred_check
      _
    $region11: #{tpu_custom_call.1} parent=1 // pred_check_branch
      %32 = sbr.rel (0) target = $region13
    $region12: #{tpu_custom_call.1} parent=1 // pred_region
      %34 = vsyncadd [#allocation3], 0
      %s35 = sshll.u32 %s2, 4
      %s36 = int_to_ptr.hbm [resolvable:$true] %s35
      %s37 = sshll.u32 [#allocation8], 4
      %s38 = int_to_ptr.vmem [resolvable:$true] %s37
      %43 = dma.hbm_to_vmem [thread:$0]  %s36, 64, %s38, [#allocation3], 16, 16, 1
    $region13: #{tpu_custom_call.1} parent=1 // pred_fallthru
      _
    // Predicated region
    $region14: #{tpu_custom_call.1} parent=1 // pred_check
      _
    $region15: #{tpu_custom_call.1} parent=1 // pred_check_branch
      %45 = sbr.rel (0) target = $region17
    $region16: #{tpu_custom_call.1} parent=1 // pred_region
      _
    $region17: #{tpu_custom_call.1} parent=1 // pred_fallthru
      _
    // Predicated region
    $region18: #{tpu_custom_call.1} parent=1 // pred_check
      _
    $region19: #{tpu_custom_call.1} parent=1 // pred_check_branch
      %47 = sbr.rel (0) target = $region21
    $region20: #{tpu_custom_call.1} parent=1 // pred_region
      %49 = dma.done [#allocation5], 16
    $region21: #{tpu_custom_call.1} parent=1 // pred_fallthru
      _
    // Predicated region
    $region22: #{tpu_custom_call.1} parent=1 // pred_check
      _
    $region23: #{tpu_custom_call.1} parent=1 // pred_check_branch
      %51 = sbr.rel (0) target = $region25
    $region24: #{tpu_custom_call.1} parent=1 // pred_region
      %53 = dma.done [#allocation7], 16
    $region25: #{tpu_custom_call.1} parent=1 // pred_fallthru
      _
    // Predicated region
    $region26: #{tpu_custom_call.1} parent=1 // pred_check
      _
    $region27: #{tpu_custom_call.1} parent=1 // pred_check_branch
      %55 = sbr.rel (0) target = $region29
    $region28: #{tpu_custom_call.1} parent=1 // pred_region
      %57 = dma.done [#allocation3], 64
    $region29: #{tpu_custom_call.1} parent=1 // pred_fallthru
      _
    %58 = sfence
    %s59 = sld [smem:[#allocation2]]
    %v60 = vld [vmem:[#allocation8] sm:$0x1]
    %v61 = vstv %s59
    %v62 = vmul.f32 %v61, %v60
    %s63 = sld [smem:[#allocation2 + $0x1]]
    %s64 = scalar_lea.vmem [#allocation8], 1
    %v65 = vld [vmem:[%s64] sm:$0x1]
    %v66 = vstv %s63
    %v67 = vmul.f32 %v66, %v65
    %v68 = vadd.f32 %v62, %v67
    %s69 = sld [smem:[#allocation2 + $0x2]]
    %s70 = scalar_lea.vmem [#allocation8], 2
    %v71 = vld [vmem:[%s70] sm:$0x1]
    %v72 = vstv %s69
    %v73 = vmul.f32 %v72, %v71
    %v74 = vadd.f32 %v68, %v73
    %s75 = sld [smem:[#allocation2 + $0x3]]
    %s76 = scalar_lea.vmem [#allocation8], 3
    %v77 = vld [vmem:[%s76] sm:$0x1]
    %v78 = vstv %s75
    %v79 = vmul.f32 %v78, %v77
    %v80 = vadd.f32 %v74, %v79
    %s81 = sld [smem:[#allocation6]]
    %v82 = vld [vmem:[%s3] sm:$0x1]
    %v83 = vstv %s81
    %v84 = vmul.f32 %v83, %v82
    %v85 = vadd.f32 %v80, %v84
    %s86 = sld [smem:[#allocation6 + $0x1]]
    %s87 = scalar_lea.vmem %s3, 1
    %v88 = vld [vmem:[%s87] sm:$0x1]
    %v89 = vstv %s86
    %v90 = vmul.f32 %v89, %v88
    %v91 = vadd.f32 %v85, %v90
    %92 = vst [vmem:[#allocation9] sm:$0x1] %v91
    %s93 = sld [smem:[#allocation2 + $0x4]]
    %v94 = vld [vmem:[#allocation8] sm:$0x1]
    %v95 = vstv %s93
    %v96 = vmul.f32 %v95, %v94
    %s97 = sld [smem:[#allocation2 + $0x5]]
    %v98 = vld [vmem:[%s64] sm:$0x1]
    %v99 = vstv %s97
    %v100 = vmul.f32 %v99, %v98
    %v101 = vadd.f32 %v96, %v100
    %s102 = sld [smem:[#allocation2 + $0x6]]
    %v103 = vld [vmem:[%s70] sm:$0x1]
    %v104 = vstv %s102
    %v105 = vmul.f32 %v104, %v103
    %v106 = vadd.f32 %v101, %v105
    %s107 = sld [smem:[#allocation2 + $0x7]]
    %v108 = vld [vmem:[%s76] sm:$0x1]
    %v109 = vstv %s107
    %v110 = vmul.f32 %v109, %v108
    %v111 = vadd.f32 %v106, %v110
    %s112 = sld [smem:[#allocation6 + $0x2]]
    %v113 = vld [vmem:[%s3] sm:$0x1]
    %v114 = vstv %s112
    %v115 = vmul.f32 %v114, %v113
    %v116 = vadd.f32 %v111, %v115
    %s117 = sld [smem:[#allocation6 + $0x3]]
    %v118 = vld [vmem:[%s87] sm:$0x1]
    %v119 = vstv %s117
    %v120 = vmul.f32 %v119, %v118
    %v121 = vadd.f32 %v116, %v120
    %s122 = scalar_lea.vmem [#allocation9], 1
    %123 = vst [vmem:[%s122] sm:$0x1] %v121
    %s124 = sld [smem:[#allocation2 + $0x8]]
    %v125 = vld [vmem:[#allocation8] sm:$0x1]
    %v126 = vstv %s124
    %v127 = vmul.f32 %v126, %v125
    %s128 = sld [smem:[#allocation2 + $0x9]]
    %v129 = vld [vmem:[%s64] sm:$0x1]
    %v130 = vstv %s128
    %v131 = vmul.f32 %v130, %v129
    %v132 = vadd.f32 %v127, %v131
    %s133 = sld [smem:[#allocation2 + $0xa]]
    %v134 = vld [vmem:[%s70] sm:$0x1]
    %v135 = vstv %s133
    %v136 = vmul.f32 %v135, %v134
    %v137 = vadd.f32 %v132, %v136
    %s138 = sld [smem:[#allocation2 + $0xb]]
    %v139 = vld [vmem:[%s76] sm:$0x1]
    %v140 = vstv %s138
    %v141 = vmul.f32 %v140, %v139
    %v142 = vadd.f32 %v137, %v141
    %s143 = sld [smem:[#allocation6 + $0x4]]
    %v144 = vld [vmem:[%s3] sm:$0x1]
    %v145 = vstv %s143
    %v146 = vmul.f32 %v145, %v144
    %v147 = vadd.f32 %v142, %v146
    %s148 = sld [smem:[#allocation6 + $0x5]]
    %v149 = vld [vmem:[%s87] sm:$0x1]
    %v150 = vstv %s148
    %v151 = vmul.f32 %v150, %v149
    %v152 = vadd.f32 %v147, %v151
    %s153 = scalar_lea.vmem [#allocation9], 2
    %154 = vst [vmem:[%s153] sm:$0x1] %v152
    %s155 = sld [smem:[#allocation2 + $0xc]]
    %v156 = vld [vmem:[#allocation8] sm:$0x1]
    %v157 = vstv %s155
    %v158 = vmul.f32 %v157, %v156
    %s159 = sld [smem:[#allocation2 + $0xd]]
    %v160 = vld [vmem:[%s64] sm:$0x1]
    %v161 = vstv %s159
    %v162 = vmul.f32 %v161, %v160
    %v163 = vadd.f32 %v158, %v162
    %s164 = sld [smem:[#allocation2 + $0xe]]
    %v165 = vld [vmem:[%s70] sm:$0x1]
    %v166 = vstv %s164
    %v167 = vmul.f32 %v166, %v165
    %v168 = vadd.f32 %v163, %v167
    %s169 = sld [smem:[#allocation2 + $0xf]]
    %v170 = vld [vmem:[%s76] sm:$0x1]
    %v171 = vstv %s169
    %v172 = vmul.f32 %v171, %v170
    %v173 = vadd.f32 %v168, %v172
    %s174 = sld [smem:[#allocation6 + $0x6]]
    %v175 = vld [vmem:[%s3] sm:$0x1]
    %v176 = vstv %s174
    %v177 = vmul.f32 %v176, %v175
    %v178 = vadd.f32 %v173, %v177
    %s179 = sld [smem:[#allocation6 + $0x7]]
    %v180 = vld [vmem:[%s87] sm:$0x1]
    %v181 = vstv %s179
    %v182 = vmul.f32 %v181, %v180
    %v183 = vadd.f32 %v178, %v182
    %s184 = scalar_lea.vmem [#allocation9], 3
    %185 = vst [vmem:[%s184] sm:$0x1] %v183
    // Predicated region
    $region30: #{tpu_custom_call.1} parent=1 // pred_check
      _
    $region31: #{tpu_custom_call.1} parent=1 // pred_check_branch
      %187 = sbr.rel (0) target = $region33
    $region32: #{tpu_custom_call.1} parent=1 // pred_region
      %189 = vsyncadd [#allocation4], 0
      %s190 = sshll.u32 [#allocation9], 4
      %s191 = int_to_ptr.vmem [resolvable:$true] %s190
      %s192 = sshll.u32 %s4, 4
      %s193 = int_to_ptr.hbm [resolvable:$true] %s192
      %198 = dma.vmem_to_hbm [thread:$0]  %s191, 64, %s193, [#allocation4], 16, 16, 1
    $region33: #{tpu_custom_call.1} parent=1 // pred_fallthru
      _
    // Predicated region
    $region34: #{tpu_custom_call.1} parent=1 // pred_check
      _
    $region35: #{tpu_custom_call.1} parent=1 // pred_check_branch
      %200 = sbr.rel (0) target = $region37
    $region36: #{tpu_custom_call.1} parent=1 // pred_region
      %202 = dma.done [#allocation4], 64
    $region37: #{tpu_custom_call.1} parent=1 // pred_fallthru
      _
    %203 = vsyncpa [#allocation3], 1
    %204 = vsyncpa [#allocation4], 1
    %205 = vsyncpa [#allocation5], 1
    %206 = vsyncpa [#allocation7], 1

</llo_original>
